<compile_context>
chip_gen: v5e
topology: v5e:2x2
jax: 0.10.0
libtpu: 0.0.40
codegen_flags: <defaults>
</compile_context>

<pallas_src>
import functools

import numpy as np
import jax
import jax.numpy as jnp
from jax.experimental import pallas as pl
from jax.experimental.pallas import tpu as pltpu


_LANES = 128


def _vmem_capacity_bytes():
    try:
        info = pltpu.get_tpu_info()
        cap = getattr(info, "vmem_capacity_bytes", None)
        if cap:
            return int(cap)
    except Exception:
        pass
    return 64 * 1024 * 1024  # conservative (v7x-sized) fallback


# ---------------------------------------------------------------------------
# Kernel
# ---------------------------------------------------------------------------
def _make_dice_stats_kernel(square, labels_path):
    """Kernel over blocks x:(1,c,tr,128) [+ labels:(1,1,tr,128) or y:(1,c,tr,128)].

    Accumulates into lane-wide resident (1,1,c,128) f32 output blocks:
      square=False: s0=Σ(x*y), s1=Σx, s2=Σy            (per lane column)
      square=True : s0=Σ(x*y)^2, s1=Σ(x*(1-y))^2, s2=Σ((1-x)*y)^2
    Inputs are pre-padded with neutral values, so no masking is needed.
    """

    def kernel(x_ref, y_ref, s0_ref, s1_ref, s2_ref):
        si = pl.program_id(2)

        @pl.when(si == 0)
        def _init():
            s0_ref[...] = jnp.zeros_like(s0_ref)
            s1_ref[...] = jnp.zeros_like(s1_ref)
            s2_ref[...] = jnp.zeros_like(s2_ref)

        x = x_ref[...].astype(jnp.float32)                    # (1, c, tr, 128)

        if labels_path:
            lab = y_ref[...]                                   # (1, 1, tr, 128) i32
            cls = jax.lax.broadcasted_iota(jnp.int32, x.shape, 1)
            yb = lab == cls                                    # in-register one-hot (bool)
            if square:
                x2 = x * x
                omx = 1.0 - x
                s0_ref[...] += jnp.sum(jnp.where(yb, x2, 0.0), axis=2)[None]
                s1_ref[...] += jnp.sum(jnp.where(yb, 0.0, x2), axis=2)[None]
                s2_ref[...] += jnp.sum(jnp.where(yb, omx * omx, 0.0), axis=2)[None]
            else:
                s0_ref[...] += jnp.sum(jnp.where(yb, x, 0.0), axis=2)[None]
                s1_ref[...] += jnp.sum(x, axis=2)[None]
                s2_ref[...] += jnp.sum(jnp.where(yb, 1.0, 0.0), axis=2)[None]
        else:
            y = y_ref[...].astype(jnp.float32)                 # (1, c, tr, 128)
            if square:
                tp = x * y
                fp = x * (1.0 - y)
                fn = (1.0 - x) * y
                s0_ref[...] += jnp.sum(tp * tp, axis=2)[None]
                s1_ref[...] += jnp.sum(fp * fp, axis=2)[None]
                s2_ref[...] += jnp.sum(fn * fn, axis=2)[None]
            else:
                s0_ref[...] += jnp.sum(x * y, axis=2)[None]
                s1_ref[...] += jnp.sum(x, axis=2)[None]
                s2_ref[...] += jnp.sum(y, axis=2)[None]

    return kernel


# ---------------------------------------------------------------------------
# Tiling / wrapper
# ---------------------------------------------------------------------------
def _choose_row_tile(R, c, itemsize, vmem_cap):
    """Rows (of 128 lanes) per x block: ~vmem_cap/16 bytes in [1 MiB, 8 MiB],
    a multiple of 8, and no larger than the (row-aligned) data."""
    target_bytes = max(1 << 20, min(8 << 20, vmem_cap // 16))
    tr = target_bytes // (c * _LANES * max(int(itemsize), 1))
    tr = max(8, (tr // 8) * 8)
    r8 = -(-R // 8) * 8
    return min(tr, r8)


def _dice_stats_pallas(x3, y_in, labels_path, square, row_tile=None, core_split=None):
    """x3: (b, c, S) activations (native dtype). y_in: (b,1,S) int32 labels or
    (b, c, S) float/soft gt. Returns s0, s1, s2 each (b, c) float32."""
    b, c, S = x3.shape
    itemsize = jnp.dtype(x3.dtype).itemsize
    vmem_cap = _vmem_capacity_bytes()

    R = -(-S // _LANES)                                   # rows of 128 lanes
    if row_tile is None:
        tr = _choose_row_tile(R, c, itemsize, vmem_cap)
    else:
        tr = max(8, (int(row_tile) // 8) * 8)

    if core_split is None:
        # Second parallel grid axis keeps both v7x TensorCores busy when b==1;
        # harmless (serialized) on single-TC chips.
        n_split = 2 if (b == 1 and R >= 2 * tr) else 1
    else:
        n_split = max(1, int(core_split))

    sps = max(1, -(-R // (n_split * tr)))                 # spatial steps per split
    R_pad = n_split * sps * tr
    S_pad = R_pad * _LANES

    if S_pad != S:
        pad = S_pad - S
        # Neutral padding -> mask-free kernel: x=0 / soft-gt=0 contribute nothing;
        # labels padded with `c` (out of range) yield an all-zero one-hot row.
        x3 = jnp.pad(x3, ((0, 0), (0, 0), (0, pad)))
        if labels_path:
            y_in = jnp.pad(y_in, ((0, 0), (0, 0), (0, pad)), constant_values=c)
        else:
            y_in = jnp.pad(y_in, ((0, 0), (0, 0), (0, pad)))

    x4 = x3.reshape(b, c, R_pad, _LANES)
    x_spec = pl.BlockSpec((1, c, tr, _LANES),
                          lambda bi, sp, si: (bi, 0, sp * sps + si, 0))
    if labels_path:
        y4 = y_in.reshape(b, 1, R_pad, _LANES)
        y_spec = pl.BlockSpec((1, 1, tr, _LANES),
                              lambda bi, sp, si: (bi, 0, sp * sps + si, 0))
    else:
        y4 = y_in.reshape(b, c, R_pad, _LANES)
        y_spec = pl.BlockSpec((1, c, tr, _LANES),
                              lambda bi, sp, si: (bi, 0, sp * sps + si, 0))

    # Lane-wide (128) f32 partial sums, resident across the spatial axis.
    out_sds = jax.ShapeDtypeStruct((b, n_split, c, _LANES), jnp.float32)
    out_spec = pl.BlockSpec((1, 1, c, _LANES), lambda bi, sp, si: (bi, sp, 0, 0))

    kernel = _make_dice_stats_kernel(square, labels_path)

    bytes_accessed = (x4.size * itemsize
                      + y4.size * jnp.dtype(y4.dtype).itemsize
                      + 3 * b * n_split * c * _LANES * 4)
    flops = 8 * x4.size  # a handful of VPU ops per (class, element)

    s0, s1, s2 = pl.pallas_call(
        kernel,
        out_shape=(out_sds, out_sds, out_sds),
        grid=(b, n_split, sps),
        in_specs=[x_spec, y_spec],
        out_specs=(out_spec, out_spec, out_spec),
        compiler_params=pltpu.CompilerParams(
            dimension_semantics=("parallel", "parallel", "arbitrary"),
            vmem_limit_bytes=int(min(vmem_cap * 3 // 4, 96 * 1024 * 1024)),
        ),
        cost_estimate=pl.CostEstimate(flops=int(flops), transcendentals=0,
                                      bytes_accessed=int(bytes_accessed)),
    )(x4, y4)

    # Fold the core-split and lane axes in tiny JAX glue.
    return s0.sum(axis=(1, 3)), s1.sum(axis=(1, 3)), s2.sum(axis=(1, 3))


# ---------------------------------------------------------------------------
# Forward (matches SoftDiceLoss.forward with apply_nonlin=None, loss_mask=None)
# ---------------------------------------------------------------------------
@functools.partial(
    jax.jit,
    static_argnames=("batch_dice", "do_bg", "smooth", "square",
                     "row_tile", "core_split"),
)
def soft_dice_loss(x, y, batch_dice=False, do_bg=True, smooth=1.0, square=False,
                   row_tile=None, core_split=None):
    """x: (b, c, *spatial). y: label map (b, *spatial) / (b, 1, *spatial) or
    one-hot / soft gt of shape == x.shape."""
    shp_x = x.shape
    b, c = shp_x[0], shp_x[1]
    spatial_shape = shp_x[2:]
    S = int(np.prod(spatial_shape)) if spatial_shape else 1

    x3 = x.reshape(b, c, S)                        # native dtype, upcast in-kernel

    if tuple(y.shape) == tuple(shp_x):
        y_in = y.reshape(b, c, S)                  # one-hot / soft gt path
        labels_path = False
    else:
        y_in = y.reshape(b, 1, S).astype(jnp.int32)  # integer label map path
        labels_path = True

    s0, s1, s2 = _dice_stats_pallas(x3, y_in, labels_path, square,
                                    row_tile=row_tile, core_split=core_split)

    if square:
        tp, fp, fn = s0, s1, s2
    else:
        tp = s0
        fp = s1 - s0
        fn = s2 - s0

    if batch_dice:
        tp, fp, fn = tp.sum(0), fp.sum(0), fn.sum(0)

    dc = (2.0 * tp + smooth) / (2.0 * tp + fp + fn + smooth)

    if not do_bg:
        dc = dc[1:] if batch_dice else dc[:, 1:]

    return -jnp.mean(dc)


# ---------------------------------------------------------------------------
# Pure-JAX reference (mirrors the torch module)
# ---------------------------------------------------------------------------
def _reference(x, y, batch_dice=False, do_bg=True, smooth=1.0, square=False):
    b, c = x.shape[0], x.shape[1]
    x = x.astype(jnp.float32)
    if tuple(y.shape) == tuple(x.shape):
        y_oh = y.astype(jnp.float32)
    else:
        y_lbl = y.reshape(b, *x.shape[2:]).astype(jnp.int32)
        y_oh = jnp.moveaxis(jax.nn.one_hot(y_lbl, c, dtype=jnp.float32), -1, 1)
    axes = tuple(range(2, x.ndim))
    if batch_dice:
        axes = (0,) + axes
    tp = x * y_oh
    fp = x * (1.0 - y_oh)
    fn = (1.0 - x) * y_oh
    if square:
        tp, fp, fn = tp ** 2, fp ** 2, fn ** 2
    tp = jnp.sum(tp, axis=axes)
    fp = jnp.sum(fp, axis=axes)
    fn = jnp.sum(fn, axis=axes)
    dc = (2.0 * tp + smooth) / (2.0 * tp + fp + fn + smooth)
    if not do_bg:
        dc = dc[1:] if batch_dice else dc[:, 1:]
    return -jnp.mean(dc)


if __name__ == "__main__":
    key = jax.random.PRNGKey(0)
    kx, ky, kx2, ky2, kx3, ky3, kx4, ky4 = jax.random.split(key, 8)

    # 1) Main case (matches module spec): b=2, c=4, 16x16, integer label map.
    x = jax.random.uniform(kx, (2, 4, 16, 16), dtype=jnp.float32)
    y = jax.random.randint(ky, (2, 16, 16), 0, 4, dtype=jnp.int32)
    loss = jax.block_until_ready(soft_dice_loss(x, y))
    ref = jax.block_until_ready(_reference(x, y))
    assert np.allclose(np.asarray(loss), np.asarray(ref), atol=1e-5, rtol=1e-5), (loss, ref)

    # 2) Multi-step spatial reduction (R=24 rows, row_tile=8 -> 3 accumulation steps).
    x2 = jax.random.uniform(kx2, (2, 4, 48, 64), dtype=jnp.float32)
    y2 = jax.random.randint(ky2, (2, 48, 64), 0, 4, dtype=jnp.int32)
    loss2 = jax.block_until_ready(soft_dice_loss(x2, y2, row_tile=8))
    ref2 = jax.block_until_ready(_reference(x2, y2))
    assert np.allclose(np.asarray(loss2), np.asarray(ref2), atol=1e-5, rtol=1e-5), (loss2, ref2)

    # 3) Ragged spatial size (S=300, not a multiple of 128 -> neutral padding path).
    x3r = jax.random.uniform(kx3, (2, 4, 10, 30), dtype=jnp.float32)
    y3r = jax.random.randint(ky3, (2, 10, 30), 0, 4, dtype=jnp.int32)
    loss3 = jax.block_until_ready(soft_dice_loss(x3r, y3r, batch_dice=True))
    ref3 = jax.block_until_ready(_reference(x3r, y3r, batch_dice=True))
    assert np.allclose(np.asarray(loss3), np.asarray(ref3), atol=1e-5, rtol=1e-5), (loss3, ref3)

    # 4) Same-shape (one-hot) gt path + square=True + do_bg=False.
    y_oh = jnp.moveaxis(jax.nn.one_hot(y, 4, dtype=jnp.float32), -1, 1)
    loss4 = jax.block_until_ready(soft_dice_loss(x, y_oh, do_bg=False, square=True))
    ref4 = jax.block_until_ready(_reference(x, y_oh, do_bg=False, square=True))
    assert np.allclose(np.asarray(loss4), np.asarray(ref4), atol=1e-5, rtol=1e-5), (loss4, ref4)

    # 5) bf16 activations stay bf16 on the wire; kernel upcasts in-register.
    xb = x.astype(jnp.bfloat16)
    loss5 = jax.block_until_ready(soft_dice_loss(xb, y))
    ref5 = jax.block_until_ready(_reference(xb.astype(jnp.float32), y))
    assert np.allclose(np.asarray(loss5), np.asarray(ref5), atol=2e-3, rtol=2e-3), (loss5, ref5)

    # 6) batch=1 with the core-split (dual-TensorCore) grid axis exercised.
    x6 = jax.random.uniform(kx4, (1, 4, 32, 64), dtype=jnp.float32)
    y6 = jax.random.randint(ky4, (1, 32, 64), 0, 4, dtype=jnp.int32)
    loss6 = jax.block_until_ready(soft_dice_loss(x6, y6, row_tile=8, core_split=2))
    ref6 = jax.block_until_ready(_reference(x6, y6))
    assert np.allclose(np.asarray(loss6), np.asarray(ref6), atol=1e-5, rtol=1e-5), (loss6, ref6)

    print("KERNEL_OK")
</pallas_src>

<mosaic_0001>
module attributes {stable_mosaic.version = 11 : i64} {
  func.func @kernel(%arg0: i32, %arg1: i32, %arg2: i32, %arg3: memref<1x4x8x128xf32, #tpu.memory_space<vmem>>, %arg4: memref<1x1x8x128xi32, #tpu.memory_space<vmem>>, %arg5: memref<1x1x4x128xf32, #tpu.memory_space<vmem>>, %arg6: memref<1x1x4x128xf32, #tpu.memory_space<vmem>>, %arg7: memref<1x1x4x128xf32, #tpu.memory_space<vmem>>) attributes {dimension_semantics = [#tpu.dimension_semantics<parallel>, #tpu.dimension_semantics<parallel>, #tpu.dimension_semantics<arbitrary>], iteration_bounds = array<i64: 2, 1, 1>, scalar_prefetch = 0 : i64, scratch_operands = 0 : i64, tpu.core_type = #tpu.core_type<tc>, window_params = [{transform_indices = @transform_0, window_bounds = array<i64: 1, 4, 8, 128>}, {transform_indices = @transform_1, window_bounds = array<i64: 1, 1, 8, 128>}, {transform_indices = @transform_2, window_bounds = array<i64: 1, 1, 4, 128>}, {transform_indices = @transform_3, window_bounds = array<i64: 1, 1, 4, 128>}, {transform_indices = @transform_4, window_bounds = array<i64: 1, 1, 4, 128>}]} {
    %c0_i32 = arith.constant 0 : i32
    %0 = arith.cmpi eq, %arg2, %c0_i32 : i32
    %1 = arith.extui %0 : i1 to i32
    %c0_i32_0 = arith.constant 0 : i32
    %2 = arith.cmpi ne, %1, %c0_i32_0 : i32
    scf.if %2 {
      %cst_37 = arith.constant 0.000000e+00 : f32
      %28 = vector.broadcast %cst_37 : f32 to vector<1x1x4x128xf32>
      %c0_38 = arith.constant 0 : index
      %c0_39 = arith.constant 0 : index
      %c0_40 = arith.constant 0 : index
      %c0_41 = arith.constant 0 : index
      %29 = vector.load %arg5[%c0_38, %c0_39, %c0_40, %c0_41] : memref<1x1x4x128xf32, #tpu.memory_space<vmem>>, vector<1x1x4x128xf32>
      tpu.vector_store %arg5[%c0_38, %c0_39, %c0_40, %c0_41], %28 {strides = array<i32>} : memref<1x1x4x128xf32, #tpu.memory_space<vmem>>, vector<1x1x4x128xf32>,
      %cst_42 = arith.constant 0.000000e+00 : f32
      %30 = vector.broadcast %cst_42 : f32 to vector<1x1x4x128xf32>
      %c0_43 = arith.constant 0 : index
      %c0_44 = arith.constant 0 : index
      %c0_45 = arith.constant 0 : index
      %c0_46 = arith.constant 0 : index
      %31 = vector.load %arg6[%c0_43, %c0_44, %c0_45, %c0_46] : memref<1x1x4x128xf32, #tpu.memory_space<vmem>>, vector<1x1x4x128xf32>
      tpu.vector_store %arg6[%c0_43, %c0_44, %c0_45, %c0_46], %30 {strides = array<i32>} : memref<1x1x4x128xf32, #tpu.memory_space<vmem>>, vector<1x1x4x128xf32>,
      %cst_47 = arith.constant 0.000000e+00 : f32
      %32 = vector.broadcast %cst_47 : f32 to vector<1x1x4x128xf32>
      %c0_48 = arith.constant 0 : index
      %c0_49 = arith.constant 0 : index
      %c0_50 = arith.constant 0 : index
      %c0_51 = arith.constant 0 : index
      %33 = vector.load %arg7[%c0_48, %c0_49, %c0_50, %c0_51] : memref<1x1x4x128xf32, #tpu.memory_space<vmem>>, vector<1x1x4x128xf32>
      tpu.vector_store %arg7[%c0_48, %c0_49, %c0_50, %c0_51], %32 {strides = array<i32>} : memref<1x1x4x128xf32, #tpu.memory_space<vmem>>, vector<1x1x4x128xf32>,
    } else {
    }
    %c0 = arith.constant 0 : index
    %c0_1 = arith.constant 0 : index
    %c0_2 = arith.constant 0 : index
    %c0_3 = arith.constant 0 : index
    %3 = vector.load %arg3[%c0, %c0_1, %c0_2, %c0_3] : memref<1x4x8x128xf32, #tpu.memory_space<vmem>>, vector<1x4x8x128xf32>
    %c0_4 = arith.constant 0 : index
    %c0_5 = arith.constant 0 : index
    %c0_6 = arith.constant 0 : index
    %c0_7 = arith.constant 0 : index
    %4 = vector.load %arg4[%c0_4, %c0_5, %c0_6, %c0_7] : memref<1x1x8x128xi32, #tpu.memory_space<vmem>>, vector<1x1x8x128xi32>
    %5 = tpu.iota {dimensions = array<i32: 1>} : vector<1x4x8x128xi32>
    %6 = vector.broadcast %4 : vector<1x1x8x128xi32> to vector<1x4x8x128xi32>
    %7 = arith.cmpi eq, %6, %5 : vector<1x4x8x128xi32>
    %c0_8 = arith.constant 0 : index
    %c0_9 = arith.constant 0 : index
    %c0_10 = arith.constant 0 : index
    %c0_11 = arith.constant 0 : index
    %8 = vector.load %arg5[%c0_8, %c0_9, %c0_10, %c0_11] : memref<1x1x4x128xf32, #tpu.memory_space<vmem>>, vector<1x1x4x128xf32>
    %cst = arith.constant 0.000000e+00 : f32
    %9 = vector.broadcast %cst : f32 to vector<1x4x8x128xf32>
    %10 = arith.select %7, %3, %9 : vector<1x4x8x128xi1>, vector<1x4x8x128xf32>
    %cst_12 = arith.constant dense<0.000000e+00> : vector<1x4x128xf32>
    %11 = vector.multi_reduction <add>, %10, %cst_12 [2] : vector<1x4x8x128xf32> to vector<1x4x128xf32>
    %12 = vector.shape_cast %11 : vector<1x4x128xf32> to vector<1x1x4x128xf32>
    %13 = arith.addf %8, %12 : vector<1x1x4x128xf32>
    %c0_13 = arith.constant 0 : index
    %c0_14 = arith.constant 0 : index
    %c0_15 = arith.constant 0 : index
    %c0_16 = arith.constant 0 : index
    %14 = vector.load %arg5[%c0_13, %c0_14, %c0_15, %c0_16] : memref<1x1x4x128xf32, #tpu.memory_space<vmem>>, vector<1x1x4x128xf32>
    tpu.vector_store %arg5[%c0_13, %c0_14, %c0_15, %c0_16], %13 {strides = array<i32>} : memref<1x1x4x128xf32, #tpu.memory_space<vmem>>, vector<1x1x4x128xf32>,
    %c0_17 = arith.constant 0 : index
    %c0_18 = arith.constant 0 : index
    %c0_19 = arith.constant 0 : index
    %c0_20 = arith.constant 0 : index
    %15 = vector.load %arg6[%c0_17, %c0_18, %c0_19, %c0_20] : memref<1x1x4x128xf32, #tpu.memory_space<vmem>>, vector<1x1x4x128xf32>
    %cst_21 = arith.constant dense<0.000000e+00> : vector<1x4x128xf32>
    %16 = vector.multi_reduction <add>, %3, %cst_21 [2] : vector<1x4x8x128xf32> to vector<1x4x128xf32>
    %17 = vector.shape_cast %16 : vector<1x4x128xf32> to vector<1x1x4x128xf32>
    %18 = arith.addf %15, %17 : vector<1x1x4x128xf32>
    %c0_22 = arith.constant 0 : index
    %c0_23 = arith.constant 0 : index
    %c0_24 = arith.constant 0 : index
    %c0_25 = arith.constant 0 : index
    %19 = vector.load %arg6[%c0_22, %c0_23, %c0_24, %c0_25] : memref<1x1x4x128xf32, #tpu.memory_space<vmem>>, vector<1x1x4x128xf32>
    tpu.vector_store %arg6[%c0_22, %c0_23, %c0_24, %c0_25], %18 {strides = array<i32>} : memref<1x1x4x128xf32, #tpu.memory_space<vmem>>, vector<1x1x4x128xf32>,
    %c0_26 = arith.constant 0 : index
    %c0_27 = arith.constant 0 : index
    %c0_28 = arith.constant 0 : index
    %c0_29 = arith.constant 0 : index
    %20 = vector.load %arg7[%c0_26, %c0_27, %c0_28, %c0_29] : memref<1x1x4x128xf32, #tpu.memory_space<vmem>>, vector<1x1x4x128xf32>
    %cst_30 = arith.constant 1.000000e+00 : f32
    %cst_31 = arith.constant 0.000000e+00 : f32
    %21 = vector.broadcast %cst_30 : f32 to vector<1x4x8x128xf32>
    %22 = vector.broadcast %cst_31 : f32 to vector<1x4x8x128xf32>
    %23 = arith.select %7, %21, %22 : vector<1x4x8x128xi1>, vector<1x4x8x128xf32>
    %cst_32 = arith.constant dense<0.000000e+00> : vector<1x4x128xf32>
    %24 = vector.multi_reduction <add>, %23, %cst_32 [2] : vector<1x4x8x128xf32> to vector<1x4x128xf32>
    %25 = vector.shape_cast %24 : vector<1x4x128xf32> to vector<1x1x4x128xf32>
    %26 = arith.addf %20, %25 : vector<1x1x4x128xf32>
    %c0_33 = arith.constant 0 : index
    %c0_34 = arith.constant 0 : index
    %c0_35 = arith.constant 0 : index
    %c0_36 = arith.constant 0 : index
    %27 = vector.load %arg7[%c0_33, %c0_34, %c0_35, %c0_36] : memref<1x1x4x128xf32, #tpu.memory_space<vmem>>, vector<1x1x4x128xf32>
    tpu.vector_store %arg7[%c0_33, %c0_34, %c0_35, %c0_36], %26 {strides = array<i32>} : memref<1x1x4x128xf32, #tpu.memory_space<vmem>>, vector<1x1x4x128xf32>,
    return
  }
  func.func @transform_0(%arg0: i32, %arg1: i32, %arg2: i32) -> (i32, i32, i32, i32) {
    %c1_i32 = arith.constant 1 : i32
    %0 = arith.muli %arg1, %c1_i32 : i32
    %1 = arith.addi %0, %arg2 : i32
    %c0_i32 = arith.constant 0 : i32
    %c0_i32_0 = arith.constant 0 : i32
    %c0_i32_1 = arith.constant 0 : i32
    return %arg0, %c0_i32, %1, %c0_i32_0 : i32, i32, i32, i32
  }
  func.func @transform_1(%arg0: i32, %arg1: i32, %arg2: i32) -> (i32, i32, i32, i32) {
    %c1_i32 = arith.constant 1 : i32
    %0 = arith.muli %arg1, %c1_i32 : i32
    %1 = arith.addi %0, %arg2 : i32
    %c0_i32 = arith.constant 0 : i32
    %c0_i32_0 = arith.constant 0 : i32
    %c0_i32_1 = arith.constant 0 : i32
    return %arg0, %c0_i32, %1, %c0_i32_0 : i32, i32, i32, i32
  }
  func.func @transform_2(%arg0: i32, %arg1: i32, %arg2: i32) -> (i32, i32, i32, i32) {
    %c0_i32 = arith.constant 0 : i32
    %c0_i32_0 = arith.constant 0 : i32
    %c0_i32_1 = arith.constant 0 : i32
    return %arg0, %arg1, %c0_i32, %c0_i32_0 : i32, i32, i32, i32
  }
  func.func @transform_3(%arg0: i32, %arg1: i32, %arg2: i32) -> (i32, i32, i32, i32) {
    %c0_i32 = arith.constant 0 : i32
    %c0_i32_0 = arith.constant 0 : i32
    %c0_i32_1 = arith.constant 0 : i32
    return %arg0, %arg1, %c0_i32, %c0_i32_0 : i32, i32, i32, i32
  }
  func.func @transform_4(%arg0: i32, %arg1: i32, %arg2: i32) -> (i32, i32, i32, i32) {
    %c0_i32 = arith.constant 0 : i32
    %c0_i32_0 = arith.constant 0 : i32
    %c0_i32_1 = arith.constant 0 : i32
    return %arg0, %arg1, %c0_i32, %c0_i32_0 : i32, i32, i32, i32
  }
}

</mosaic_0001>

<llo_original>
// kernel: soft_dice_loss.1
$region0: #{soft_dice_loss.1}
  #allocation0 [shape = 'u32[]', space=smem, size = 0x4, offset = 0x4, fixed_abs, tag = 'smem constant byte address 0x4 - core index']
  #allocation1 [shape = 'u32[72,128]{1,0:T(1,128)}', space=vmem, size = 0x9000, scoped, tag = 'internal scratch']
  %s0 = inlined_call_operand.vmem [shape: f32[2,4,8,128], index: 0, kind: input, shape index: {}]
  %s1 = inlined_call_operand.vmem [shape: s32[2,1,8,128], index: 1, kind: input, shape index: {}]
  %s2 = inlined_call_operand.vmem [shape: f32[2,1,4,128], index: 2, kind: output, shape index: {0}]
  %s3 = inlined_call_operand.vmem [shape: f32[2,1,4,128], index: 3, kind: output, shape index: {1}]
  %s4 = inlined_call_operand.vmem [shape: f32[2,1,4,128], index: 4, kind: output, shape index: {2}]
  %5 = xla_tuple %s2, %s3, %s4
  %s6 = sld [smem:[#allocation0]]
  $region61: #{soft_dice_loss.1} parent=0
    _
  %s8 = ssub.s32 1, %s6
  %s9 = scalar_select 0, %s8, %s6
  loop: start=0, step=1, limit=4
  $region2: #{soft_dice_loss.1} parent=0 // loop_pre_header
    _
  $region3: #{soft_dice_loss.1} parent=0 // loop_header
    %s11 = sphi 0, %s15
    %p12 = scmp.ge.s32.totalorder %s11, 4
    %s18 = sphi 0, %s37
    %s19 = sphi 0, %s33
    %s20 = sphi 0, %s29
    %s21 = sphi 0, %s18
    %s22 = sphi 0, %s19
    %s23 = sphi 0, %s20
    %s24 = sphi 0, %s21
    %s25 = sphi 0, %s22
    %s26 = sphi 0, %s23
    %s44 = sphi 0, %s46
    %s47 = sphi 0, %s44
    %s48 = sphi 0, %s47
    %s64 = sphi 0, %s48
    %s74 = sphi 0, %s76
    %s77 = sphi 0, %s74
    %s78 = sphi 0, %s77
    %s94 = sphi 0, %s78
    %s102 = sphi 0, %s104
    %s105 = sphi 0, %s102
    %s106 = sphi 0, %s105
    %s122 = sphi 0, %s106
    %s130 = sphi 0, %s132
    %s133 = sphi 0, %s130
    %s134 = sphi 0, %s133
    %s150 = sphi 0, %s134
    %s158 = sphi 0, %s160
    %s161 = sphi 0, %s158
    %s162 = sphi 0, %s161
    %s178 = sphi 0, %s162
  $region4: #{soft_dice_loss.1} parent=0 // loop_header_branch
    %14 = sbr.rel (%p12) target = $region8
  $region5: #{soft_dice_loss.1} parent=0 // loop_body
    %s16 = ssub.s32 %s11, 1
    %s17 = ssub.s32 %s11, 2
    %s27 = sadd.s32 1, %s20
    %p28 = scmp.ge.s32.totalorder %s27, 1
    %s29 = scalar_select %p28, 0, %s27
    %s30 = sadd.s32 1, %s19
    %s31 = scalar_select %p28, %s30, %s19
    %p32 = scmp.ge.s32.totalorder %s31, 1
    %s33 = scalar_select %p32, 0, %s31
    %s34 = sadd.s32 1, %s18
    %s35 = scalar_select %p32, %s34, %s18
    %p36 = scmp.ge.s32.totalorder %s35, 2
    %s37 = scalar_select %p36, 0, %s35
    %s38 = sadd.s32 %s19, %s20
    %s39 = sadd.s32 %s33, %s29
    %s40 = ssub.s32 %s18, %s37
    %s41 = ssub.s32 %s38, %s39
    %s42 = sor.u32 %s40, %s41
    %p43 = scmp.eq.s32.totalorder %s42, 0
    %s45 = sadd.s32 %s44, 1
    %s46 = scalar_select %p43, %s44, %s45
    %p49 = pneg %p43
    %p50 = scmp.eq.s32.totalorder %s11, 1
    %p51 = por %p49, %p50
    %p52 = scmp.ne.s32.totalorder %s44, %s47
    %p53 = scmp.eq.s32.totalorder %s11, 0
    %p54 = por %p52, %p53
    %p55 = scmp.ne.s32.totalorder %s44, %s47
    %p56 = scmp.eq.s32.totalorder %s16, 1
    %p57 = por %p55, %p56
    %p58 = scmp.ne.s32.totalorder %s47, %s48
    %p59 = scmp.eq.s32.totalorder %s16, 0
    %p60 = por %p58, %p59
    %p61 = scmp.ne.s32.totalorder %s47, %s48
    %p62 = scmp.eq.s32.totalorder %s17, 1
    %p63 = por %p61, %p62
    %p65 = scmp.ne.s32.totalorder %s48, %s64
    %p66 = scmp.eq.s32.totalorder %s17, 0
    %p67 = por %p65, %p66
    %s68 = sadd.s32 %s19, %s20
    %s69 = sadd.s32 %s33, %s29
    %s70 = ssub.s32 %s18, %s37
    %s71 = ssub.s32 %s68, %s69
    %s72 = sor.u32 %s70, %s71
    %p73 = scmp.eq.s32.totalorder %s72, 0
    %s75 = sadd.s32 %s74, 1
    %s76 = scalar_select %p73, %s74, %s75
    %p79 = pneg %p73
    %p80 = scmp.eq.s32.totalorder %s11, 1
    %p81 = por %p79, %p80
    %p82 = scmp.ne.s32.totalorder %s74, %s77
    %p83 = scmp.eq.s32.totalorder %s11, 0
    %p84 = por %p82, %p83
    %p85 = scmp.ne.s32.totalorder %s74, %s77
    %p86 = scmp.eq.s32.totalorder %s16, 1
    %p87 = por %p85, %p86
    %p88 = scmp.ne.s32.totalorder %s77, %s78
    %p89 = scmp.eq.s32.totalorder %s16, 0
    %p90 = por %p88, %p89
    %p91 = scmp.ne.s32.totalorder %s77, %s78
    %p92 = scmp.eq.s32.totalorder %s17, 1
    %p93 = por %p91, %p92
    %p95 = scmp.ne.s32.totalorder %s78, %s94
    %p96 = scmp.eq.s32.totalorder %s17, 0
    %p97 = por %p95, %p96
    %s98 = ssub.s32 %s18, %s37
    %s99 = ssub.s32 %s19, %s33
    %s100 = sor.u32 %s98, %s99
    %p101 = scmp.eq.s32.totalorder %s100, 0
    %s103 = sadd.s32 %s102, 1
    %s104 = scalar_select %p101, %s102, %s103
    %p107 = pneg %p101
    %p108 = scmp.eq.s32.totalorder %s11, 1
    %p109 = por %p107, %p108
    %p110 = scmp.ne.s32.totalorder %s102, %s105
    %p111 = scmp.eq.s32.totalorder %s11, 0
    %p112 = por %p110, %p111
    %p113 = scmp.ne.s32.totalorder %s102, %s105
    %p114 = scmp.eq.s32.totalorder %s16, 1
    %p115 = por %p113, %p114
    %p116 = scmp.ne.s32.totalorder %s105, %s106
    %p117 = scmp.eq.s32.totalorder %s16, 0
    %p118 = por %p116, %p117
    %p119 = scmp.ne.s32.totalorder %s105, %s106
    %p120 = scmp.eq.s32.totalorder %s17, 1
    %p121 = por %p119, %p120
    %p123 = scmp.ne.s32.totalorder %s106, %s122
    %p124 = scmp.eq.s32.totalorder %s17, 0
    %p125 = por %p123, %p124
    %s126 = ssub.s32 %s18, %s37
    %s127 = ssub.s32 %s19, %s33
    %s128 = sor.u32 %s126, %s127
    %p129 = scmp.eq.s32.totalorder %s128, 0
    %s131 = sadd.s32 %s130, 1
    %s132 = scalar_select %p129, %s130, %s131
    %p135 = pneg %p129
    %p136 = scmp.eq.s32.totalorder %s11, 1
    %p137 = por %p135, %p136
    %p138 = scmp.ne.s32.totalorder %s130, %s133
    %p139 = scmp.eq.s32.totalorder %s11, 0
    %p140 = por %p138, %p139
    %p141 = scmp.ne.s32.totalorder %s130, %s133
    %p142 = scmp.eq.s32.totalorder %s16, 1
    %p143 = por %p141, %p142
    %p144 = scmp.ne.s32.totalorder %s133, %s134
    %p145 = scmp.eq.s32.totalorder %s16, 0
    %p146 = por %p144, %p145
    %p147 = scmp.ne.s32.totalorder %s133, %s134
    %p148 = scmp.eq.s32.totalorder %s17, 1
    %p149 = por %p147, %p148
    %p151 = scmp.ne.s32.totalorder %s134, %s150
    %p152 = scmp.eq.s32.totalorder %s17, 0
    %p153 = por %p151, %p152
    %s154 = ssub.s32 %s18, %s37
    %s155 = ssub.s32 %s19, %s33
    %s156 = sor.u32 %s154, %s155
    %p157 = scmp.eq.s32.totalorder %s156, 0
    %s159 = sadd.s32 %s158, 1
    %s160 = scalar_select %p157, %s158, %s159
    %p163 = pneg %p157
    %p164 = scmp.eq.s32.totalorder %s11, 1
    %p165 = por %p163, %p164
    %p166 = scmp.ne.s32.totalorder %s158, %s161
    %p167 = scmp.eq.s32.totalorder %s11, 0
    %p168 = por %p166, %p167
    %p169 = scmp.ne.s32.totalorder %s158, %s161
    %p170 = scmp.eq.s32.totalorder %s16, 1
    %p171 = por %p169, %p170
    %p172 = scmp.ne.s32.totalorder %s161, %s162
    %p173 = scmp.eq.s32.totalorder %s16, 0
    %p174 = por %p172, %p173
    %p175 = scmp.ne.s32.totalorder %s161, %s162
    %p176 = scmp.eq.s32.totalorder %s17, 1
    %p177 = por %p175, %p176
    %p179 = scmp.ne.s32.totalorder %s162, %s178
    %p180 = scmp.eq.s32.totalorder %s17, 0
    %p181 = por %p179, %p180
    %p182 = scmp.le.s32.totalorder 1, %s11
    %p183 = scmp.lt.s32.totalorder %s11, 3
    %p184 = pnand %p182, %p183
    %p185 = pneg %p184
    // Predicated region
    $region9: #{soft_dice_loss.1} parent=5 // pred_check
      _
    $region10: #{soft_dice_loss.1} parent=5 // pred_check_branch
      %187 = sbr.rel (%p184) target = $region12
    $region11: #{soft_dice_loss.1} parent=5 // pred_region
      %s188 = ssub.s32 %s11, 1
    $region12: #{soft_dice_loss.1} parent=5 // pred_fallthru
      _
    %p189 = scmp.lt.s32.totalorder %s11, 2
    // Predicated region
    $region13: #{soft_dice_loss.1} parent=5 // pred_check
      %p190 = pneg %p189
    $region14: #{soft_dice_loss.1} parent=5 // pred_check_branch
      %192 = sbr.rel (%p190) target = $region16
    $region15: #{soft_dice_loss.1} parent=5 // pred_region
      // Predicated region
      $region17: #{soft_dice_loss.1} parent=15 // pred_check
        %p193 = pneg %p54
      $region18: #{soft_dice_loss.1} parent=15 // pred_check_branch
        %195 = sbr.rel (%p193) target = $region20
      $region19: #{soft_dice_loss.1} parent=15 // pred_region
        %s196 = sadd.s32 %s19, %s20
        %p197 = scmp.lt.s32.totalorder %s18, 1
        %s198 = scalar_select %p197, %s18, 1
        %p199 = scmp.lt.s32.totalorder %s196, 0
        %s200 = scalar_select %p199, %s196, 0
        %s201 = smul.addr %s198, 4
        %s202 = sadd.s32 %s200, %s201
        %s203 = smul.addr %s202, 8
        %s204 = scalar_lea.vmem %s0, %s203
        %s205 = sadd.s32 %s19, %s20
      $region20: #{soft_dice_loss.1} parent=15 // pred_fallthru
        _
      // Predicated region
      $region21: #{soft_dice_loss.1} parent=15 // pred_check
        %p206 = pneg %p84
      $region22: #{soft_dice_loss.1} parent=15 // pred_check_branch
        %208 = sbr.rel (%p206) target = $region24
      $region23: #{soft_dice_loss.1} parent=15 // pred_region
        %s209 = sadd.s32 %s19, %s20
        %p210 = scmp.lt.s32.totalorder %s18, 1
        %s211 = scalar_select %p210, %s18, 1
        %p212 = scmp.lt.s32.totalorder %s209, 0
        %s213 = scalar_select %p212, %s209, 0
        %s214 = sadd.s32 %s213, %s211
        %s215 = smul.addr %s214, 8
        %s216 = scalar_lea.vmem %s1, %s215
        %s217 = sadd.s32 %s19, %s20
      $region24: #{soft_dice_loss.1} parent=15 // pred_fallthru
        _
    $region16: #{soft_dice_loss.1} parent=5 // pred_fallthru
      _
    %p218 = scmp.le.s32.totalorder 1, %s11
    %p219 = scmp.lt.s32.totalorder %s11, 3
    %p220 = pnand %p218, %p219
    %p221 = pneg %p220
    // Predicated region
    $region25: #{soft_dice_loss.1} parent=5 // pred_check
      _
    $region26: #{soft_dice_loss.1} parent=5 // pred_check_branch
      %223 = sbr.rel (%p220) target = $region28
    $region27: #{soft_dice_loss.1} parent=5 // pred_region
      %s224 = ssub.s32 %s11, 1
      %s225 = sadd.s32 %s22, %s23
      %p226 = scmp.lt.s32.totalorder %s21, 1
      %s227 = scalar_select %p226, %s21, 1
      %p228 = scmp.lt.s32.totalorder %s225, 0
      %s229 = scalar_select %p228, %s225, 0
      %s230 = smul.addr %s227, 4
      %s231 = sadd.s32 %s229, %s230
      %s232 = smul.addr %s231, 8
      %s233 = scalar_lea.vmem %s0, %s232
      %p234 = pneg %p60
      %p235 = pneg %p57
      %s236 = sadd.s32 %s22, %s23
      %p237 = scmp.lt.s32.totalorder %s21, 1
      %s238 = scalar_select %p237, %s21, 1
      %p239 = scmp.lt.s32.totalorder %s236, 0
      %s240 = scalar_select %p239, %s236, 0
      %s241 = sadd.s32 %s240, %s238
      %s242 = smul.addr %s241, 8
      %s243 = scalar_lea.vmem %s1, %s242
      %p244 = pneg %p90
      %p245 = pneg %p87
      %p246 = pneg %p118
      %p247 = pneg %p115
      %p248 = scmp.lt.s32.totalorder %s21, 1
      %s249 = scalar_select %p248, %s21, 1
      %p250 = scmp.lt.s32.totalorder %s22, 0
      %s251 = scalar_select %p250, %s22, 0
      %s252 = sadd.s32 %s251, %s249
      %s253 = smul.addr %s252, 4
      %s254 = scalar_lea.vmem %s2, %s253
      %p255 = pneg %p146
      %p256 = pneg %p143
      %p257 = scmp.lt.s32.totalorder %s21, 1
      %s258 = scalar_select %p257, %s21, 1
      %p259 = scmp.lt.s32.totalorder %s22, 0
      %s260 = scalar_select %p259, %s22, 0
      %s261 = sadd.s32 %s260, %s258
      %s262 = smul.addr %s261, 4
      %s263 = scalar_lea.vmem %s3, %s262
      %p264 = pneg %p174
      %p265 = pneg %p171
      %p266 = scmp.lt.s32.totalorder %s21, 1
      %s267 = scalar_select %p266, %s21, 1
      %p268 = scmp.lt.s32.totalorder %s22, 0
      %s269 = scalar_select %p268, %s22, 0
      %s270 = sadd.s32 %s269, %s267
      %s271 = smul.addr %s270, 4
      %s272 = scalar_lea.vmem %s4, %s271
      %s273 = sadd.s32 %s22, %s23
      %p274 = scmp.lt.s32.totalorder %s21, 1
      %s275 = scalar_select %p274, %s21, 1
      %p276 = scmp.lt.s32.totalorder %s273, 0
      %s277 = scalar_select %p276, %s273, 0
      %s278 = smul.addr %s275, 4
      %s279 = sadd.s32 %s277, %s278
      %s280 = smul.addr %s279, 8
      %s281 = scalar_lea.vmem %s0, %s280
      %s282 = sadd.s32 %s22, %s23
      %s283 = sadd.s32 %s22, %s23
      %p284 = scmp.lt.s32.totalorder %s21, 1
      %s285 = scalar_select %p284, %s21, 1
      %p286 = scmp.lt.s32.totalorder %s283, 0
      %s287 = scalar_select %p286, %s283, 0
      %s288 = sadd.s32 %s287, %s285
      %s289 = smul.addr %s288, 8
      %s290 = scalar_lea.vmem %s1, %s289
      %s291 = sadd.s32 %s22, %s23
      %p292 = scmp.lt.s32.totalorder %s21, 1
      %s293 = scalar_select %p292, %s21, 1
      %p294 = scmp.lt.s32.totalorder %s22, 0
      %s295 = scalar_select %p294, %s22, 0
      %s296 = sadd.s32 %s295, %s293
      %s297 = smul.addr %s296, 4
      %s298 = scalar_lea.vmem %s2, %s297
      %p299 = scmp.lt.s32.totalorder %s21, 1
      %s300 = scalar_select %p299, %s21, 1
      %p301 = scmp.lt.s32.totalorder %s22, 0
      %s302 = scalar_select %p301, %s22, 0
      %s303 = sadd.s32 %s302, %s300
      %s304 = smul.addr %s303, 4
      %s305 = scalar_lea.vmem %s3, %s304
      %p306 = scmp.lt.s32.totalorder %s21, 1
      %s307 = scalar_select %p306, %s21, 1
      %p308 = scmp.lt.s32.totalorder %s22, 0
      %s309 = scalar_select %p308, %s22, 0
      %s310 = sadd.s32 %s309, %s307
      %s311 = smul.addr %s310, 4
      %s312 = scalar_lea.vmem %s4, %s311
      %p313 = scmp.eq.s32.totalorder %s23, 0
      // Predicated region
      $region29: #{soft_dice_loss.1} parent=27 // pred_check
        %p314 = pneg %p313
      $region30: #{soft_dice_loss.1} parent=27 // pred_check_branch
        %316 = sbr.rel (%p314) target = $region32
      $region31: #{soft_dice_loss.1} parent=27 // pred_region
        %317 = vst [vmem:[%s298] sm:$0xf] 0.0
        %318 = vst [vmem:[%s305] sm:$0xf] 0.0
        %319 = vst [vmem:[%s312] sm:$0xf] 0.0
      $region32: #{soft_dice_loss.1} parent=27 // pred_fallthru
        _
      %v320 = vld [vmem:[%s281] sm:$0xff]
      %v321 = vld [vmem:[%s281 + $0x8] sm:$0xff]
      %v322 = vld [vmem:[%s281 + $0x10] sm:$0xff]
      %v323 = vld [vmem:[%s281 + $0x18] sm:$0xff]
      %v324 = vld [vmem:[%s290] sm:$0xff]
      %vm325 = vcmp.eq.s32.totalorder %v324, 0
      %vm326 = vcmp.eq.s32.totalorder %v324, 1
      %vm327 = vcmp.eq.s32.totalorder %v324, 2
      %vm328 = vcmp.eq.s32.totalorder %v324, 3
      %v329 = vld [vmem:[%s298] sm:$0xf]
      %v330 = vsel %vm325, %v320, 0.0
      %v331 = vsel %vm326, %v321, 0.0
      %v332 = vsel %vm327, %v322, 0.0
      %v333 = vsel %vm328, %v323, 0.0
      %v334 = vrot.slane %v330, 4
      %v335 = vadd.f32 %v330, %v334
      %v336 = vrot.slane %v335, 2
      %v337 = vadd.f32 %v335, %v336
      %v338 = vrot.slane %v337, 1
      %v339 = vadd.f32 %v337, %v338
      %v340 = vrot.slane %v331, 4
      %v341 = vadd.f32 %v331, %v340
      %v342 = vrot.slane %v341, 2
      %v343 = vadd.f32 %v341, %v342
      %v344 = vrot.slane %v343, 1
      %v345 = vadd.f32 %v343, %v344
      %v346 = vrot.slane %v332, 4
      %v347 = vadd.f32 %v332, %v346
      %v348 = vrot.slane %v347, 2
      %v349 = vadd.f32 %v347, %v348
      %v350 = vrot.slane %v349, 1
      %v351 = vadd.f32 %v349, %v350
      %v352 = vrot.slane %v333, 4
      %v353 = vadd.f32 %v333, %v352
      %v354 = vrot.slane %v353, 2
      %v355 = vadd.f32 %v353, %v354
      %v356 = vrot.slane %v355, 1
      %v357 = vadd.f32 %v355, %v356
      %vm362 = vcmask 1041409
      %v363 = vsel %vm362, %v345, %v339
      %vm364 = vcmask 1042434
      %v365 = vsel %vm364, %v351, %v363
      %vm366 = vcmask 1043459
      %v367 = vsel %vm366, %v357, %v365
      %v369 = vadd.f32 %v329, %v367
      %370 = vst [vmem:[%s298] sm:$0xf] %v369
      %v371 = vld [vmem:[%s305] sm:$0xf]
      %v372 = vrot.slane %v320, 4
      %v373 = vadd.f32 %v320, %v372
      %v374 = vrot.slane %v373, 2
      %v375 = vadd.f32 %v373, %v374
      %v376 = vrot.slane %v375, 1
      %v377 = vadd.f32 %v375, %v376
      %v378 = vrot.slane %v321, 4
      %v379 = vadd.f32 %v321, %v378
      %v380 = vrot.slane %v379, 2
      %v381 = vadd.f32 %v379, %v380
      %v382 = vrot.slane %v381, 1
      %v383 = vadd.f32 %v381, %v382
      %v384 = vrot.slane %v322, 4
      %v385 = vadd.f32 %v322, %v384
      %v386 = vrot.slane %v385, 2
      %v387 = vadd.f32 %v385, %v386
      %v388 = vrot.slane %v387, 1
      %v389 = vadd.f32 %v387, %v388
      %v390 = vrot.slane %v323, 4
      %v391 = vadd.f32 %v323, %v390
      %v392 = vrot.slane %v391, 2
      %v393 = vadd.f32 %v391, %v392
      %v394 = vrot.slane %v393, 1
      %v395 = vadd.f32 %v393, %v394
      %v400 = vsel %vm362, %v383, %v377
      %v401 = vsel %vm364, %v389, %v400
      %v402 = vsel %vm366, %v395, %v401
      %v404 = vadd.f32 %v371, %v402
      %405 = vst [vmem:[%s305] sm:$0xf] %v404
      %v406 = vld [vmem:[%s312] sm:$0xf]
      %v407 = vsel %vm325, 1.0, 0.0
      %v408 = vsel %vm326, 1.0, 0.0
      %v409 = vsel %vm327, 1.0, 0.0
      %v410 = vsel %vm328, 1.0, 0.0
      %v411 = vrot.slane %v407, 4
      %v412 = vadd.f32 %v407, %v411
      %v413 = vrot.slane %v412, 2
      %v414 = vadd.f32 %v412, %v413
      %v415 = vrot.slane %v414, 1
      %v416 = vadd.f32 %v414, %v415
      %v417 = vrot.slane %v408, 4
      %v418 = vadd.f32 %v408, %v417
      %v419 = vrot.slane %v418, 2
      %v420 = vadd.f32 %v418, %v419
      %v421 = vrot.slane %v420, 1
      %v422 = vadd.f32 %v420, %v421
      %v423 = vrot.slane %v409, 4
      %v424 = vadd.f32 %v409, %v423
      %v425 = vrot.slane %v424, 2
      %v426 = vadd.f32 %v424, %v425
      %v427 = vrot.slane %v426, 1
      %v428 = vadd.f32 %v426, %v427
      %v429 = vrot.slane %v410, 4
      %v430 = vadd.f32 %v410, %v429
      %v431 = vrot.slane %v430, 2
      %v432 = vadd.f32 %v430, %v431
      %v433 = vrot.slane %v432, 1
      %v434 = vadd.f32 %v432, %v433
      %v439 = vsel %vm362, %v422, %v416
      %v440 = vsel %vm364, %v428, %v439
      %v441 = vsel %vm366, %v434, %v440
      %v443 = vadd.f32 %v406, %v441
      %444 = vst [vmem:[%s312] sm:$0xf] %v443
      %p445 = scmp.lt.s32.totalorder %s21, 1
      %s446 = scalar_select %p445, %s21, 1
      %p447 = scmp.lt.s32.totalorder %s22, 0
      %s448 = scalar_select %p447, %s22, 0
      %s449 = sadd.s32 %s448, %s446
      %s450 = smul.addr %s449, 4
      %s451 = scalar_lea.vmem %s2, %s450
      %p452 = scmp.lt.s32.totalorder %s21, 1
      %s453 = scalar_select %p452, %s21, 1
      %p454 = scmp.lt.s32.totalorder %s22, 0
      %s455 = scalar_select %p454, %s22, 0
      %s456 = sadd.s32 %s455, %s453
      %s457 = smul.addr %s456, 4
      %s458 = scalar_lea.vmem %s3, %s457
      %p459 = scmp.lt.s32.totalorder %s21, 1
      %s460 = scalar_select %p459, %s21, 1
      %p461 = scmp.lt.s32.totalorder %s22, 0
      %s462 = scalar_select %p461, %s22, 0
      %s463 = sadd.s32 %s462, %s460
      %s464 = smul.addr %s463, 4
      %s465 = scalar_lea.vmem %s4, %s464
      // Predicated region
      $region33: #{soft_dice_loss.1} parent=27 // pred_check
        %p466 = pneg %p115
      $region34: #{soft_dice_loss.1} parent=27 // pred_check_branch
        %468 = sbr.rel (%p466) target = $region36
      $region35: #{soft_dice_loss.1} parent=27 // pred_region
        _
      $region36: #{soft_dice_loss.1} parent=27 // pred_fallthru
        _
      // Predicated region
      $region37: #{soft_dice_loss.1} parent=27 // pred_check
        %p469 = pneg %p143
      $region38: #{soft_dice_loss.1} parent=27 // pred_check_branch
        %471 = sbr.rel (%p469) target = $region40
      $region39: #{soft_dice_loss.1} parent=27 // pred_region
        _
      $region40: #{soft_dice_loss.1} parent=27 // pred_fallthru
        _
      // Predicated region
      $region41: #{soft_dice_loss.1} parent=27 // pred_check
        %p472 = pneg %p171
      $region42: #{soft_dice_loss.1} parent=27 // pred_check_branch
        %474 = sbr.rel (%p472) target = $region44
      $region43: #{soft_dice_loss.1} parent=27 // pred_region
        _
      $region44: #{soft_dice_loss.1} parent=27 // pred_fallthru
        _
    $region28: #{soft_dice_loss.1} parent=5 // pred_fallthru
      _
    %p475 = scmp.le.s32.totalorder 2, %s11
    // Predicated region
    $region45: #{soft_dice_loss.1} parent=5 // pred_check
      %p476 = pneg %p475
    $region46: #{soft_dice_loss.1} parent=5 // pred_check_branch
      %478 = sbr.rel (%p476) target = $region48
    $region47: #{soft_dice_loss.1} parent=5 // pred_region
      %s479 = ssub.s32 %s11, 2
      // Predicated region
      $region49: #{soft_dice_loss.1} parent=47 // pred_check
        %p480 = pneg %p121
      $region50: #{soft_dice_loss.1} parent=47 // pred_check_branch
        %482 = sbr.rel (%p480) target = $region52
      $region51: #{soft_dice_loss.1} parent=47 // pred_region
        %p483 = scmp.lt.s32.totalorder %s24, 1
        %s484 = scalar_select %p483, %s24, 1
        %p485 = scmp.lt.s32.totalorder %s25, 0
        %s486 = scalar_select %p485, %s25, 0
        %s487 = sadd.s32 %s486, %s484
        %s488 = smul.addr %s487, 4
        %s489 = scalar_lea.vmem %s2, %s488
      $region52: #{soft_dice_loss.1} parent=47 // pred_fallthru
        _
      // Predicated region
      $region53: #{soft_dice_loss.1} parent=47 // pred_check
        %p490 = pneg %p149
      $region54: #{soft_dice_loss.1} parent=47 // pred_check_branch
        %492 = sbr.rel (%p490) target = $region56
      $region55: #{soft_dice_loss.1} parent=47 // pred_region
        %p493 = scmp.lt.s32.totalorder %s24, 1
        %s494 = scalar_select %p493, %s24, 1
        %p495 = scmp.lt.s32.totalorder %s25, 0
        %s496 = scalar_select %p495, %s25, 0
        %s497 = sadd.s32 %s496, %s494
        %s498 = smul.addr %s497, 4
        %s499 = scalar_lea.vmem %s3, %s498
      $region56: #{soft_dice_loss.1} parent=47 // pred_fallthru
        _
      // Predicated region
      $region57: #{soft_dice_loss.1} parent=47 // pred_check
        %p500 = pneg %p177
      $region58: #{soft_dice_loss.1} parent=47 // pred_check_branch
        %502 = sbr.rel (%p500) target = $region60
      $region59: #{soft_dice_loss.1} parent=47 // pred_region
        %p503 = scmp.lt.s32.totalorder %s24, 1
        %s504 = scalar_select %p503, %s24, 1
        %p505 = scmp.lt.s32.totalorder %s25, 0
        %s506 = scalar_select %p505, %s25, 0
        %s507 = sadd.s32 %s506, %s504
        %s508 = smul.addr %s507, 4
        %s509 = scalar_lea.vmem %s4, %s508
      $region60: #{soft_dice_loss.1} parent=47 // pred_fallthru
        _
    $region48: #{soft_dice_loss.1} parent=5 // pred_fallthru
      _
  $region6: #{soft_dice_loss.1} parent=0 // loop_footer
    %s15 = sadd.s32 1, %s11
  $region7: #{soft_dice_loss.1} parent=0 // loop_footer_branch
    %10 = sbr.rel target = $region3
  $region8: #{soft_dice_loss.1} parent=0 // loop_exit
    _

</llo_original>
